<compile_context>
chip_gen: v6e
topology: v6e:2x2x1
jax: 0.10.0
libtpu: 0.0.40
codegen_flags: <defaults>
</compile_context>

<pallas_src>
import jax
import jax.numpy as jnp
from jax.experimental import pallas as pl
from jax.experimental.pallas import tpu as pltpu

_LANES = 128                   # vreg lane width
_TARGET_BLOCK_BYTES = 2 << 20  # ~2 MiB per block per array (HBM-bound on all gens)


def _min_sublanes(dtype):
    # Minimum second-minor tile granularity: 8 (32-bit), 16 (16-bit), 32 (8-bit).
    return max(8, 32 // jnp.dtype(dtype).itemsize)


def _plan(a):
    """Plan a lane-dense, MiB-scale tiling for one array.

    Returns (view, block_shape, n_blocks).  `view` is always a metadata-only
    (contiguous, row-major) reshape of `a` -- never a data copy.
    """
    n = a.size
    itemsize = jnp.dtype(a.dtype).itemsize
    sub = _min_sublanes(a.dtype)

    if n >= _LANES and n % _LANES == 0:
        rows = n // _LANES
        view = a.reshape(rows, _LANES)  # free reshape -> lane-dense slab
        max_rows = max(sub, (_TARGET_BLOCK_BYTES // (_LANES * itemsize)) // sub * sub)
        if rows > max_rows:
            # Row-tiled copy; a ragged final block is handled by Pallas masking.
            return view, (max_rows, _LANES), pl.cdiv(rows, max_rows)
        return view, (rows, _LANES), 1  # single full-array block
    # Not lane-reshapeable (element count not a multiple of 128): copy with a
    # single full-array block in the original shape (legal: block == full dims).
    # TODO(synk): arrays in this branch that exceed VMEM would need a padded
    # layout; irrelevant for Coder-sized latents/features.
    return a, a.shape, 1


def _index_map(n_blocks, ndim):
    """Block-index map for one array on the shared 1-D grid."""
    if n_blocks == 1:
        zeros = (0,) * ndim
        return lambda i: zeros
    # Tiled along the leading (row) axis; clamp so a shorter array simply
    # revisits (and keeps resident) its last block on trailing grid steps.
    last = n_blocks - 1
    return lambda i: (jnp.minimum(i, last),) + (0,) * (ndim - 1)


def _coder_identity_kernel(z_ref, x_ref, z_out_ref, x_out_ref):
    # Identity pass-through: the abstract base class defines no math.
    z_out_ref[...] = z_ref[...]
    x_out_ref[...] = x_ref[...]


def coder_forward(z_f, x_f):
    """Pallas 'forward' for the abstract Coder module (identity pass-through).

    z_f: [B, hidden]; x_f: NCHW [B, C, H, W].  Shapes and dtypes are preserved.
    """
    z_view, z_block, z_nb = _plan(z_f)
    x_view, x_block, x_nb = _plan(x_f)
    grid = (max(z_nb, x_nb),)

    z_out, x_out = pl.pallas_call(
        _coder_identity_kernel,
        out_shape=(
            jax.ShapeDtypeStruct(z_view.shape, z_view.dtype),
            jax.ShapeDtypeStruct(x_view.shape, x_view.dtype),
        ),
        grid=grid,
        in_specs=[
            pl.BlockSpec(z_block, _index_map(z_nb, z_view.ndim)),
            pl.BlockSpec(x_block, _index_map(x_nb, x_view.ndim)),
        ],
        out_specs=[
            pl.BlockSpec(z_block, _index_map(z_nb, z_view.ndim)),
            pl.BlockSpec(x_block, _index_map(x_nb, x_view.ndim)),
        ],
        compiler_params=pltpu.CompilerParams(
            # "arbitrary": the shorter array's constant/clamped output block is
            # kept resident across the grid, which must not be core-sharded.
            dimension_semantics=("arbitrary",),
            vmem_limit_bytes=32 << 20,
        ),
    )(z_view, x_view)

    return z_out.reshape(z_f.shape), x_out.reshape(x_f.shape)


if __name__ == "__main__":
    key = jax.random.PRNGKey(0)
    kz, kx = jax.random.split(key)

    # Small, deterministic example inputs consistent with a latent / feature pair.
    z_f = jax.random.normal(kz, (2, 32), dtype=jnp.float32)          # [B, hidden]
    x_f = jax.random.normal(kx, (2, 4, 16, 16), dtype=jnp.float32)   # NCHW [B, C, H, W]

    fwd = jax.jit(coder_forward)
    z_out, x_out = fwd(z_f, x_f)
    jax.block_until_ready((z_out, x_out))

    # Sanity-check the identity semantics (the only semantics the base class admits).
    assert z_out.shape == z_f.shape and x_out.shape == x_f.shape
    assert z_out.dtype == z_f.dtype and x_out.dtype == x_f.dtype
    assert bool(jnp.allclose(z_out, z_f)) and bool(jnp.allclose(x_out, x_f))

    print("KERNEL_OK")
</pallas_src>

<mosaic_0001>
module attributes {stable_mosaic.version = 11 : i64} {
  func.func @_coder_identity_kernel(%arg0: i32, %arg1: memref<2x32xf32, #tpu.memory_space<vmem>>, %arg2: memref<16x128xf32, #tpu.memory_space<vmem>>, %arg3: memref<2x32xf32, #tpu.memory_space<vmem>>, %arg4: memref<16x128xf32, #tpu.memory_space<vmem>>) attributes {dimension_semantics = [#tpu.dimension_semantics<arbitrary>], iteration_bounds = array<i64: 1>, scalar_prefetch = 0 : i64, scratch_operands = 0 : i64, tpu.core_type = #tpu.core_type<tc>, window_params = [{pipeline_mode = #tpu.pipeline_mode<synchronous>, transform_indices = @transform_0, window_bounds = array<i64: 2, 32>}, {pipeline_mode = #tpu.pipeline_mode<synchronous>, transform_indices = @transform_1, window_bounds = array<i64: 16, 128>}, {pipeline_mode = #tpu.pipeline_mode<synchronous>, transform_indices = @transform_2, window_bounds = array<i64: 2, 32>}, {pipeline_mode = #tpu.pipeline_mode<synchronous>, transform_indices = @transform_3, window_bounds = array<i64: 16, 128>}]} {
    %c0 = arith.constant 0 : index
    %c0_0 = arith.constant 0 : index
    %0 = vector.load %arg1[%c0, %c0_0] : memref<2x32xf32, #tpu.memory_space<vmem>>, vector<2x32xf32>
    %c0_1 = arith.constant 0 : index
    %c0_2 = arith.constant 0 : index
    %1 = vector.load %arg3[%c0_1, %c0_2] : memref<2x32xf32, #tpu.memory_space<vmem>>, vector<2x32xf32>
    tpu.vector_store %arg3[%c0_1, %c0_2], %0 {strides = array<i32>} : memref<2x32xf32, #tpu.memory_space<vmem>>, vector<2x32xf32>,
    %c0_3 = arith.constant 0 : index
    %c0_4 = arith.constant 0 : index
    %2 = vector.load %arg2[%c0_3, %c0_4] : memref<16x128xf32, #tpu.memory_space<vmem>>, vector<16x128xf32>
    %c0_5 = arith.constant 0 : index
    %c0_6 = arith.constant 0 : index
    %3 = vector.load %arg4[%c0_5, %c0_6] : memref<16x128xf32, #tpu.memory_space<vmem>>, vector<16x128xf32>
    tpu.vector_store %arg4[%c0_5, %c0_6], %2 {strides = array<i32>} : memref<16x128xf32, #tpu.memory_space<vmem>>, vector<16x128xf32>,
    return
  }
  func.func @transform_0(%arg0: i32) -> (i32, i32) {
    %c0_i32 = arith.constant 0 : i32
    %c0_i32_0 = arith.constant 0 : i32
    %c0_i32_1 = arith.constant 0 : i32
    return %c0_i32, %c0_i32_0 : i32, i32
  }
  func.func @transform_1(%arg0: i32) -> (i32, i32) {
    %c0_i32 = arith.constant 0 : i32
    %c0_i32_0 = arith.constant 0 : i32
    %c0_i32_1 = arith.constant 0 : i32
    return %c0_i32, %c0_i32_0 : i32, i32
  }
  func.func @transform_2(%arg0: i32) -> (i32, i32) {
    %c0_i32 = arith.constant 0 : i32
    %c0_i32_0 = arith.constant 0 : i32
    %c0_i32_1 = arith.constant 0 : i32
    return %c0_i32, %c0_i32_0 : i32, i32
  }
  func.func @transform_3(%arg0: i32) -> (i32, i32) {
    %c0_i32 = arith.constant 0 : i32
    %c0_i32_0 = arith.constant 0 : i32
    %c0_i32_1 = arith.constant 0 : i32
    return %c0_i32, %c0_i32_0 : i32, i32
  }
}

</mosaic_0001>

<llo_original>
// kernel: coder_forward.1
$region0: #{coder_forward.1}
  #allocation0 [shape = 'u32[]', space=smem, size = 0x4, offset = 0x4, fixed_abs, tag = 'smem constant byte address 0x4 - core index']
  #allocation1 [shape = 'u32[144,128]{1,0:T(1,128)}', space=vmem, size = 0x12000, scoped, tag = 'internal scratch']
  %s0 = inlined_call_operand.vmem [shape: f32[2,32], index: 0, kind: input, shape index: {}]
  %s1 = inlined_call_operand.vmem [shape: f32[16,128], index: 1, kind: input, shape index: {}]
  %s2 = inlined_call_operand.hbm [shape: f32[2,32], index: 2, kind: output, shape index: {0}]
  %s3 = inlined_call_operand.vmem [shape: f32[16,128], index: 3, kind: output, shape index: {1}]
  %4 = xla_tuple %s2, %s3
  %s5 = sld [smem:[#allocation0]]
  $region26: #{coder_forward.1} parent=0
    _
  %s7 = ssub.s32 1, %s5
  %s8 = scalar_select 0, %s7, %s5
  $region1: #{coder_forward.1} parent=0
    #allocation2 [shape = 'u8[1024]{0}', space=vmem, size = 0x400, scoped, tag = 'output window, operand 0, single buffered']
    #allocation3 [shape = 's32[1]{0}', space=sflag, size = 0x4, scoped, tag = 'scoped memory for coder_forward.1']
    %9 = vsyncpa [#allocation3], 0
    // Predicated region
    $region2: #{coder_forward.1} parent=1 // pred_check
      _
    $region3: #{coder_forward.1} parent=1 // pred_check_branch
      %11 = sbr.rel (0) target = $region5
    $region4: #{coder_forward.1} parent=1 // pred_region
      _
    $region5: #{coder_forward.1} parent=1 // pred_fallthru
      _
    // Predicated region
    $region6: #{coder_forward.1} parent=1 // pred_check
      _
    $region7: #{coder_forward.1} parent=1 // pred_check_branch
      %13 = sbr.rel (0) target = $region9
    $region8: #{coder_forward.1} parent=1 // pred_region
      _
    $region9: #{coder_forward.1} parent=1 // pred_fallthru
      _
    %v14 = vld [vmem:[%s0] sm:$0x3]
    %vm15 = vcmask 254976
    %16 = vst.msk [vmem:[#allocation2] sm:$0x3] %vm15, %v14
    %v17 = vld [vmem:[%s1] sm:$0xff]
    %v18 = vld [vmem:[%s1 + $0x8] sm:$0xff]
    %19 = vst [vmem:[%s3] sm:$0xff] %v17
    %20 = vst [vmem:[%s3 + $0x8] sm:$0xff] %v18
    // Predicated region
    $region10: #{coder_forward.1} parent=1 // pred_check
      _
    $region11: #{coder_forward.1} parent=1 // pred_check_branch
      %22 = sbr.rel (0) target = $region13
    $region12: #{coder_forward.1} parent=1 // pred_region
      %s24 = ssub.s32 32, 32
      %25 = vsyncadd [#allocation3], %s24
      %s27 = sshll.u32 [#allocation2], 4
      %s28 = int_to_ptr.vmem [resolvable:$true] %s27
      %30 = dma.vmem_to_hbm [thread:$0]  %s28, 32, %s2, [#allocation3]
    $region13: #{coder_forward.1} parent=1 // pred_fallthru
      _
    // Predicated region
    $region14: #{coder_forward.1} parent=1 // pred_check
      _
    $region15: #{coder_forward.1} parent=1 // pred_check_branch
      %32 = sbr.rel (0) target = $region17
    $region16: #{coder_forward.1} parent=1 // pred_region
      _
    $region17: #{coder_forward.1} parent=1 // pred_fallthru
      _
    // Predicated region
    $region18: #{coder_forward.1} parent=1 // pred_check
      _
    $region19: #{coder_forward.1} parent=1 // pred_check_branch
      %34 = sbr.rel (0) target = $region21
    $region20: #{coder_forward.1} parent=1 // pred_region
      %35 = dma.done [#allocation3], 32
    $region21: #{coder_forward.1} parent=1 // pred_fallthru
      _
    // Predicated region
    $region22: #{coder_forward.1} parent=1 // pred_check
      _
    $region23: #{coder_forward.1} parent=1 // pred_check_branch
      %37 = sbr.rel (0) target = $region25
    $region24: #{coder_forward.1} parent=1 // pred_region
      _
    $region25: #{coder_forward.1} parent=1 // pred_fallthru
      _
    %38 = vsyncpa [#allocation3], 1

</llo_original>
